<compile_context>
chip_gen: v7x
topology: tpu7x:2x2x1
jax: 0.10.0
libtpu: 0.0.40
codegen_flags: <defaults>
</compile_context>

<pallas_src>
import jax
import jax.numpy as jnp
from jax.experimental import pallas as pl
from jax.experimental.pallas import tpu as pltpu

# ---- small, self-consistent shapes (stand-ins for 300/300 in the original) ----
EMBED_SIZE = 32        # original: 300 (pad to 384 at production sizes)
ENCODER_HIDDEN = 32    # original: 300 (pad to 384 at production sizes)
FC_HIDDEN = 32
NUM_CLASSES = 3
NUM_CLASSES_PAD = 128  # lane-dense logits storage; sliced to NUM_CLASSES outside
VOCAB = 64
BATCH = 2
SEQ = 8
KSIZE = 3              # conv kernel size, padding=1

# batch tile: each grid step processes TILE_B examples (= 2*TILE_B sequences).
# Size this against the VMEM budget at production shapes; 1 at toy shapes so the
# grid/pipeline path is actually exercised.
TILE_B = 1

# MXU operand dtype (accumulation is always f32 via preferred_element_type).
MXU_DTYPE = jnp.bfloat16


# ----------------------------- fused Pallas kernel ------------------------------

def _conv1d_k3_relu(x_f32, w_ref, b_ref, halo_ref):
    """x_f32: (N, S, C) f32 activations.  w_ref: (3, C, H) conv taps (MXU dtype),
    b_ref: (1, H) f32.  halo_ref: (N, S+2, C) f32 VMEM scratch for the pad=1 halo.
    Returns relu(conv1d(x, k=3, pad=1) + b) as (N, S, H) f32.
    Three shifted dots accumulate into one f32 value instead of building a
    (N*S, 3C) im2col slab."""
    n, s, c = x_f32.shape
    hdim = w_ref.shape[-1]

    # pad=1 halo: zero boundary rows + payload, written once into VMEM scratch.
    zrow = jnp.zeros((n, 1, c), halo_ref.dtype)
    halo_ref[:, 0:1, :] = zrow
    halo_ref[:, s + 1:s + 2, :] = zrow
    halo_ref[:, 1:s + 1, :] = x_f32.astype(halo_ref.dtype)

    acc = jnp.zeros((n * s, hdim), jnp.float32)
    for k in range(KSIZE):                                   # static, unrolled
        win = halo_ref[:, k:k + s, :].reshape(n * s, c).astype(MXU_DTYPE)
        acc = acc + jnp.dot(win, w_ref[k], preferred_element_type=jnp.float32)
    return jnp.maximum(acc + b_ref[...], 0.0).reshape(n, s, hdim)


def fused_classifier_kernel(emb_ref, wc1_ref, bc1_ref, wc2_ref, bc2_ref,
                            w1a_ref, w1b_ref, b1_ref, w2_ref, b2_ref,
                            o_ref, halo1_ref, halo2_ref):
    """emb_ref: (TILE_B, 2, S, E) — sentence-1/2 embeddings (already unsorted in
    the wrapper) for TILE_B examples.  wc*: (3, Cin, H) conv taps, bc*: (1, H).
    w1a/w1b: the two halves of linear1's weight (so no (B,2H) concat is built).
    w2/b2 padded to NUM_CLASSES_PAD lanes.  o_ref: (TILE_B, 1, 128) lane-dense
    logits.  halo*: (2*TILE_B, S+2, C) f32 conv halo scratches."""
    tb, two, s, e = emb_ref.shape
    n = tb * two
    hdim = wc1_ref.shape[-1]

    # encoder: conv1+ReLU -> conv2+ReLU; all intermediates stay in VMEM/vregs.
    x = emb_ref[...].reshape(n, s, e).astype(jnp.float32)
    h1 = _conv1d_k3_relu(x, wc1_ref, bc1_ref, halo1_ref)      # (n, S, H) f32
    h2 = _conv1d_k3_relu(h1, wc2_ref, bc2_ref, halo2_ref)     # (n, S, H) f32

    # max-pool over the sequence dim (XLU reduce), then split the sentence pair.
    pooled = jnp.max(h2.reshape(tb, two, s, hdim), axis=2)    # (TILE_B, 2, H)
    e1 = pooled[:, 0, :].astype(MXU_DTYPE)                    # sentence-1 encodings
    e2 = pooled[:, 1, :].astype(MXU_DTYPE)                    # sentence-2 encodings

    # MLP head: relu(e1@W1a + e2@W1b + b1) @ W2 + b2 (no lane-concat needed).
    hid = jnp.maximum(
        jnp.dot(e1, w1a_ref[...], preferred_element_type=jnp.float32)
        + jnp.dot(e2, w1b_ref[...], preferred_element_type=jnp.float32)
        + b1_ref[...], 0.0)
    logits = jnp.dot(hid.astype(MXU_DTYPE), w2_ref[...],
                     preferred_element_type=jnp.float32) + b2_ref[...]
    o_ref[...] = logits[:, None, :]                           # lane-dense store


# ----------------------------- wrapper ------------------------------------------

def classifier_forward(params, sent1, sent2, length1, length2,
                       idx_unsort_1, idx_unsort_2):
    # lengths are accepted (as in the PyTorch forward) but the CNN ignores them:
    # the max-pool runs over all S positions, exactly like the reference module.
    del length1, length2
    bsz, seq = sent1.shape
    e_dim = params["emb"].shape[1]
    h_dim = params["w_c1"].shape[-1]
    fc = params["w1"].shape[-1]
    assert bsz % TILE_B == 0

    # idx_unsort applied to token ids (encoder is per-row, so gathering rows
    # before encoding == index_select after); makes the kernel batch-tileable.
    tokens = jnp.stack([jnp.take(sent1, idx_unsort_1, axis=0),
                        jnp.take(sent2, idx_unsort_2, axis=0)], axis=1)  # (B,2,S)

    # Embedding lookup (bf16 halves its HBM->VMEM traffic).
    # TODO(synk): gather embedding rows in-kernel at production sizes (scalar
    #   prefetch tokens + HBM-resident table) to drop this HBM round-trip.
    emb = params["emb"].astype(MXU_DTYPE)[tokens]             # (B, 2, S, E)

    # Weights cast to the MXU operand dtype once here; biases stay f32 (they are
    # added to the f32 accumulator).  W1 split into halves; W2/b2 padded to a
    # lane-dense 128-wide class dim (sliced back after the kernel).
    wc1 = params["w_c1"].astype(MXU_DTYPE)                    # (3, E, H)
    wc2 = params["w_c2"].astype(MXU_DTYPE)                    # (3, H, H)
    w1a = params["w1"][:h_dim].astype(MXU_DTYPE)              # (H, FC)
    w1b = params["w1"][h_dim:].astype(MXU_DTYPE)              # (H, FC)
    w2p = jnp.pad(params["w2"],
                  ((0, 0), (0, NUM_CLASSES_PAD - NUM_CLASSES))).astype(MXU_DTYPE)
    b2p = jnp.pad(params["b2"], ((0, 0), (0, NUM_CLASSES_PAD - NUM_CLASSES)))

    const3 = lambda i: (0, 0, 0)   # weights: DMA'd once, VMEM-resident
    const2 = lambda i: (0, 0)

    out = pl.pallas_call(
        fused_classifier_kernel,
        out_shape=jax.ShapeDtypeStruct((bsz, 1, NUM_CLASSES_PAD), jnp.float32),
        grid_spec=pltpu.PrefetchScalarGridSpec(
            num_scalar_prefetch=0,
            grid=(bsz // TILE_B,),
            in_specs=[
                pl.BlockSpec((TILE_B, 2, seq, e_dim), lambda i: (i, 0, 0, 0)),
                pl.BlockSpec((KSIZE, e_dim, h_dim), const3),
                pl.BlockSpec((1, h_dim), const2),
                pl.BlockSpec((KSIZE, h_dim, h_dim), const3),
                pl.BlockSpec((1, h_dim), const2),
                pl.BlockSpec((h_dim, fc), const2),
                pl.BlockSpec((h_dim, fc), const2),
                pl.BlockSpec((1, fc), const2),
                pl.BlockSpec((fc, NUM_CLASSES_PAD), const2),
                pl.BlockSpec((1, NUM_CLASSES_PAD), const2),
            ],
            out_specs=pl.BlockSpec((TILE_B, 1, NUM_CLASSES_PAD),
                                   lambda i: (i, 0, 0)),
            scratch_shapes=[
                pltpu.VMEM((2 * TILE_B, seq + 2, e_dim), jnp.float32),
                pltpu.VMEM((2 * TILE_B, seq + 2, h_dim), jnp.float32),
            ],
        ),
        compiler_params=pltpu.CompilerParams(
            dimension_semantics=("parallel",),      # v7x: shard tiles over 2 TCs
            vmem_limit_bytes=32 * 1024 * 1024,      # explicit budget; size TILE_B
        ),                                          # against ~24 MiB on v7x
    )(emb, wc1, params["b_c1"], wc2, params["b_c2"],
      w1a, w1b, params["b1"], w2p, b2p)

    return out.reshape(bsz, NUM_CLASSES_PAD)[:, :NUM_CLASSES]


# ----------------------------- pure-JAX reference --------------------------------

def _ref_forward(params, sent1, sent2, idx1, idx2, op_dtype=jnp.float32):
    """Mirrors the PyTorch module.  op_dtype controls the matmul operand dtype so
    the kernel (bf16 operands, f32 accumulation) can be checked tightly."""
    def conv_relu(x, w, b):
        xp = jnp.pad(x, ((0, 0), (1, 1), (0, 0)))
        s = x.shape[1]
        out = sum(jnp.einsum("bsc,cd->bsd",
                             xp[:, k:k + s, :].astype(op_dtype),
                             w[k].astype(op_dtype),
                             preferred_element_type=jnp.float32)
                  for k in range(KSIZE)) + b
        return jnp.maximum(out, 0.0)

    def enc(t):
        e = params["emb"].astype(op_dtype)[t].astype(jnp.float32)
        h = conv_relu(e, params["w_c1"], params["b_c1"])
        h = conv_relu(h, params["w_c2"], params["b_c2"])
        return jnp.max(h, axis=1)

    e1 = jnp.take(enc(sent1), idx1, axis=0)
    e2 = jnp.take(enc(sent2), idx2, axis=0)
    c = jnp.concatenate([e1, e2], axis=1)
    h = jnp.maximum(jnp.dot(c.astype(op_dtype), params["w1"].astype(op_dtype),
                            preferred_element_type=jnp.float32) + params["b1"], 0.0)
    return jnp.dot(h.astype(op_dtype), params["w2"].astype(op_dtype),
                   preferred_element_type=jnp.float32) + params["b2"]


# ----------------------------- main -----------------------------------------------

if __name__ == "__main__":
    key = jax.random.PRNGKey(0)
    ks = jax.random.split(key, 12)

    params = {
        "emb":  jax.random.normal(ks[0], (VOCAB, EMBED_SIZE), jnp.float32) * 0.1,
        "w_c1": jax.random.normal(ks[1], (KSIZE, EMBED_SIZE, ENCODER_HIDDEN), jnp.float32) * 0.1,
        "b_c1": jax.random.normal(ks[2], (1, ENCODER_HIDDEN), jnp.float32) * 0.1,
        "w_c2": jax.random.normal(ks[3], (KSIZE, ENCODER_HIDDEN, ENCODER_HIDDEN), jnp.float32) * 0.1,
        "b_c2": jax.random.normal(ks[4], (1, ENCODER_HIDDEN), jnp.float32) * 0.1,
        "w1":   jax.random.normal(ks[5], (2 * ENCODER_HIDDEN, FC_HIDDEN), jnp.float32) * 0.1,
        "b1":   jax.random.normal(ks[6], (1, FC_HIDDEN), jnp.float32) * 0.1,
        "w2":   jax.random.normal(ks[7], (FC_HIDDEN, NUM_CLASSES), jnp.float32) * 0.1,
        "b2":   jax.random.normal(ks[8], (1, NUM_CLASSES), jnp.float32) * 0.1,
    }

    sent1 = jax.random.randint(ks[9], (BATCH, SEQ), 0, VOCAB, dtype=jnp.int32)
    sent2 = jax.random.randint(ks[10], (BATCH, SEQ), 0, VOCAB, dtype=jnp.int32)
    length1 = jnp.full((BATCH,), SEQ, jnp.int32)   # unused by the forward pass
    length2 = jnp.full((BATCH,), SEQ, jnp.int32)
    idx_unsort_1 = jnp.array([1, 0], jnp.int32)
    idx_unsort_2 = jnp.array([0, 1], jnp.int32)

    fwd = jax.jit(classifier_forward)
    out = fwd(params, sent1, sent2, length1, length2, idx_unsort_1, idx_unsort_2)
    out = jax.block_until_ready(out)
    assert out.shape == (BATCH, NUM_CLASSES)

    # tight check vs a reference using the same bf16-operand / f32-accum arithmetic
    ref_matched = _ref_forward(params, sent1, sent2, idx_unsort_1, idx_unsort_2,
                               op_dtype=MXU_DTYPE)
    assert jnp.allclose(out, ref_matched, atol=2e-3, rtol=2e-3), \
        "mismatch vs bf16-operand JAX reference"

    # loose check vs the pure-f32 module semantics (bf16 operand rounding only)
    ref_f32 = _ref_forward(params, sent1, sent2, idx_unsort_1, idx_unsort_2)
    assert jnp.allclose(out, ref_f32, atol=2e-2, rtol=2e-2), \
        "mismatch vs f32 JAX reference"

    print("KERNEL_OK")
</pallas_src>

<mosaic_0001>
module attributes {stable_mosaic.version = 11 : i64} {
  func.func @fused_classifier_kernel(%arg0: i32, %arg1: memref<1x2x8x32xbf16, #tpu.memory_space<vmem>>, %arg2: memref<3x32x32xbf16, #tpu.memory_space<vmem>>, %arg3: memref<1x32xf32, #tpu.memory_space<vmem>>, %arg4: memref<3x32x32xbf16, #tpu.memory_space<vmem>>, %arg5: memref<1x32xf32, #tpu.memory_space<vmem>>, %arg6: memref<32x32xbf16, #tpu.memory_space<vmem>>, %arg7: memref<32x32xbf16, #tpu.memory_space<vmem>>, %arg8: memref<1x32xf32, #tpu.memory_space<vmem>>, %arg9: memref<32x128xbf16, #tpu.memory_space<vmem>>, %arg10: memref<1x128xf32, #tpu.memory_space<vmem>>, %arg11: memref<1x1x128xf32, #tpu.memory_space<vmem>>, %arg12: memref<2x10x32xf32, #tpu.memory_space<vmem>>, %arg13: memref<2x10x32xf32, #tpu.memory_space<vmem>>) attributes {dimension_semantics = [#tpu.dimension_semantics<parallel>], iteration_bounds = array<i64: 2>, scalar_prefetch = 0 : i64, scratch_operands = 2 : i64, tpu.core_type = #tpu.core_type<tc>, window_params = [{transform_indices = @transform_0, window_bounds = array<i64: 1, 2, 8, 32>}, {pipeline_mode = #tpu.pipeline_mode<synchronous>, transform_indices = @transform_1, window_bounds = array<i64: 3, 32, 32>}, {pipeline_mode = #tpu.pipeline_mode<synchronous>, transform_indices = @transform_2, window_bounds = array<i64: 1, 32>}, {pipeline_mode = #tpu.pipeline_mode<synchronous>, transform_indices = @transform_3, window_bounds = array<i64: 3, 32, 32>}, {pipeline_mode = #tpu.pipeline_mode<synchronous>, transform_indices = @transform_4, window_bounds = array<i64: 1, 32>}, {pipeline_mode = #tpu.pipeline_mode<synchronous>, transform_indices = @transform_5, window_bounds = array<i64: 32, 32>}, {pipeline_mode = #tpu.pipeline_mode<synchronous>, transform_indices = @transform_6, window_bounds = array<i64: 32, 32>}, {pipeline_mode = #tpu.pipeline_mode<synchronous>, transform_indices = @transform_7, window_bounds = array<i64: 1, 32>}, {pipeline_mode = #tpu.pipeline_mode<synchronous>, transform_indices = @transform_8, window_bounds = array<i64: 32, 128>}, {pipeline_mode = #tpu.pipeline_mode<synchronous>, transform_indices = @transform_9, window_bounds = array<i64: 1, 128>}, {transform_indices = @transform_10, window_bounds = array<i64: 1, 1, 128>}]} {
    %c0 = arith.constant 0 : index
    %c0_0 = arith.constant 0 : index
    %c0_1 = arith.constant 0 : index
    %c0_2 = arith.constant 0 : index
    %0 = vector.load %arg1[%c0, %c0_0, %c0_1, %c0_2] : memref<1x2x8x32xbf16, #tpu.memory_space<vmem>>, vector<1x2x8x32xbf16>
    %1 = vector.shape_cast %0 : vector<1x2x8x32xbf16> to vector<2x8x32xbf16>
    %2 = arith.extf %1 : vector<2x8x32xbf16> to vector<2x8x32xf32>
    %cst = arith.constant 0.000000e+00 : f32
    %3 = vector.broadcast %cst : f32 to vector<2x1x32xf32>
    %c0_3 = arith.constant 0 : index
    %c0_4 = arith.constant 0 : index
    %c0_5 = arith.constant 0 : index
    %4 = vector.load %arg12[%c0_3, %c0_4, %c0_5] : memref<2x10x32xf32, #tpu.memory_space<vmem>>, vector<2x1x32xf32>
    tpu.vector_store %arg12[%c0_3, %c0_4, %c0_5], %3 {strides = array<i32>} : memref<2x10x32xf32, #tpu.memory_space<vmem>>, vector<2x1x32xf32>,
    %c0_6 = arith.constant 0 : index
    %c9 = arith.constant 9 : index
    %c0_7 = arith.constant 0 : index
    %5 = vector.load %arg12[%c0_6, %c9, %c0_7] : memref<2x10x32xf32, #tpu.memory_space<vmem>>, vector<2x1x32xf32>
    tpu.vector_store %arg12[%c0_6, %c9, %c0_7], %3 {strides = array<i32>} : memref<2x10x32xf32, #tpu.memory_space<vmem>>, vector<2x1x32xf32>,
    %c0_8 = arith.constant 0 : index
    %c1 = arith.constant 1 : index
    %c0_9 = arith.constant 0 : index
    %6 = vector.load %arg12[%c0_8, %c1, %c0_9] : memref<2x10x32xf32, #tpu.memory_space<vmem>>, vector<2x8x32xf32>
    tpu.vector_store %arg12[%c0_8, %c1, %c0_9], %2 {strides = array<i32>} : memref<2x10x32xf32, #tpu.memory_space<vmem>>, vector<2x8x32xf32>,
    %cst_10 = arith.constant 0.000000e+00 : f32
    %7 = vector.broadcast %cst_10 : f32 to vector<16x32xf32>
    %c0_11 = arith.constant 0 : index
    %c0_12 = arith.constant 0 : index
    %c0_13 = arith.constant 0 : index
    %8 = vector.load %arg12[%c0_11, %c0_12, %c0_13] : memref<2x10x32xf32, #tpu.memory_space<vmem>>, vector<2x8x32xf32>
    %9 = vector.shape_cast %8 : vector<2x8x32xf32> to vector<16x32xf32>
    %10 = arith.truncf %9 : vector<16x32xf32> to vector<16x32xbf16>
    %c0_14 = arith.constant 0 : index
    %c0_15 = arith.constant 0 : index
    %c0_16 = arith.constant 0 : index
    %11 = vector.load %arg2[%c0_14, %c0_15, %c0_16] : memref<3x32x32xbf16, #tpu.memory_space<vmem>>, vector<1x32x32xbf16>
    %12 = vector.shape_cast %11 : vector<1x32x32xbf16> to vector<32x32xbf16>
    %cst_17 = arith.constant dense<0.000000e+00> : vector<16x32xf32>
    %13 = tpu.matmul %10, %12, %cst_17 {dimension_numbers = #tpu.dot_dimension_numbers<[1], [0], [0], [1], [0, 0, 1, 1], [], []>} : vector<16x32xbf16>, vector<32x32xbf16>, vector<16x32xf32> -> vector<16x32xf32>
    %14 = arith.addf %7, %13 : vector<16x32xf32>
    %c0_18 = arith.constant 0 : index
    %c1_19 = arith.constant 1 : index
    %c0_20 = arith.constant 0 : index
    %15 = vector.load %arg12[%c0_18, %c1_19, %c0_20] : memref<2x10x32xf32, #tpu.memory_space<vmem>>, vector<2x8x32xf32>
    %16 = vector.shape_cast %15 : vector<2x8x32xf32> to vector<16x32xf32>
    %17 = arith.truncf %16 : vector<16x32xf32> to vector<16x32xbf16>
    %c1_21 = arith.constant 1 : index
    %c0_22 = arith.constant 0 : index
    %c0_23 = arith.constant 0 : index
    %18 = vector.load %arg2[%c1_21, %c0_22, %c0_23] : memref<3x32x32xbf16, #tpu.memory_space<vmem>>, vector<1x32x32xbf16>
    %19 = vector.shape_cast %18 : vector<1x32x32xbf16> to vector<32x32xbf16>
    %cst_24 = arith.constant dense<0.000000e+00> : vector<16x32xf32>
    %20 = tpu.matmul %17, %19, %cst_24 {dimension_numbers = #tpu.dot_dimension_numbers<[1], [0], [0], [1], [0, 0, 1, 1], [], []>} : vector<16x32xbf16>, vector<32x32xbf16>, vector<16x32xf32> -> vector<16x32xf32>
    %21 = arith.addf %14, %20 : vector<16x32xf32>
    %c0_25 = arith.constant 0 : index
    %c2 = arith.constant 2 : index
    %c0_26 = arith.constant 0 : index
    %22 = vector.load %arg12[%c0_25, %c2, %c0_26] : memref<2x10x32xf32, #tpu.memory_space<vmem>>, vector<2x8x32xf32>
    %23 = vector.shape_cast %22 : vector<2x8x32xf32> to vector<16x32xf32>
    %24 = arith.truncf %23 : vector<16x32xf32> to vector<16x32xbf16>
    %c2_27 = arith.constant 2 : index
    %c0_28 = arith.constant 0 : index
    %c0_29 = arith.constant 0 : index
    %25 = vector.load %arg2[%c2_27, %c0_28, %c0_29] : memref<3x32x32xbf16, #tpu.memory_space<vmem>>, vector<1x32x32xbf16>
    %26 = vector.shape_cast %25 : vector<1x32x32xbf16> to vector<32x32xbf16>
    %cst_30 = arith.constant dense<0.000000e+00> : vector<16x32xf32>
    %27 = tpu.matmul %24, %26, %cst_30 {dimension_numbers = #tpu.dot_dimension_numbers<[1], [0], [0], [1], [0, 0, 1, 1], [], []>} : vector<16x32xbf16>, vector<32x32xbf16>, vector<16x32xf32> -> vector<16x32xf32>
    %28 = arith.addf %21, %27 : vector<16x32xf32>
    %c0_31 = arith.constant 0 : index
    %c0_32 = arith.constant 0 : index
    %29 = vector.load %arg3[%c0_31, %c0_32] : memref<1x32xf32, #tpu.memory_space<vmem>>, vector<1x32xf32>
    %30 = vector.broadcast %29 : vector<1x32xf32> to vector<16x32xf32>
    %31 = arith.addf %28, %30 : vector<16x32xf32>
    %cst_33 = arith.constant 0.000000e+00 : f32
    %32 = vector.broadcast %cst_33 : f32 to vector<16x32xf32>
    %33 = arith.maximumf %31, %32 : vector<16x32xf32>
    %34 = vector.shape_cast %33 : vector<16x32xf32> to vector<2x8x32xf32>
    %cst_34 = arith.constant 0.000000e+00 : f32
    %35 = vector.broadcast %cst_34 : f32 to vector<2x1x32xf32>
    %c0_35 = arith.constant 0 : index
    %c0_36 = arith.constant 0 : index
    %c0_37 = arith.constant 0 : index
    %36 = vector.load %arg13[%c0_35, %c0_36, %c0_37] : memref<2x10x32xf32, #tpu.memory_space<vmem>>, vector<2x1x32xf32>
    tpu.vector_store %arg13[%c0_35, %c0_36, %c0_37], %35 {strides = array<i32>} : memref<2x10x32xf32, #tpu.memory_space<vmem>>, vector<2x1x32xf32>,
    %c0_38 = arith.constant 0 : index
    %c9_39 = arith.constant 9 : index
    %c0_40 = arith.constant 0 : index
    %37 = vector.load %arg13[%c0_38, %c9_39, %c0_40] : memref<2x10x32xf32, #tpu.memory_space<vmem>>, vector<2x1x32xf32>
    tpu.vector_store %arg13[%c0_38, %c9_39, %c0_40], %35 {strides = array<i32>} : memref<2x10x32xf32, #tpu.memory_space<vmem>>, vector<2x1x32xf32>,
    %c0_41 = arith.constant 0 : index
    %c1_42 = arith.constant 1 : index
    %c0_43 = arith.constant 0 : index
    %38 = vector.load %arg13[%c0_41, %c1_42, %c0_43] : memref<2x10x32xf32, #tpu.memory_space<vmem>>, vector<2x8x32xf32>
    tpu.vector_store %arg13[%c0_41, %c1_42, %c0_43], %34 {strides = array<i32>} : memref<2x10x32xf32, #tpu.memory_space<vmem>>, vector<2x8x32xf32>,
    %cst_44 = arith.constant 0.000000e+00 : f32
    %39 = vector.broadcast %cst_44 : f32 to vector<16x32xf32>
    %c0_45 = arith.constant 0 : index
    %c0_46 = arith.constant 0 : index
    %c0_47 = arith.constant 0 : index
    %40 = vector.load %arg13[%c0_45, %c0_46, %c0_47] : memref<2x10x32xf32, #tpu.memory_space<vmem>>, vector<2x8x32xf32>
    %41 = vector.shape_cast %40 : vector<2x8x32xf32> to vector<16x32xf32>
    %42 = arith.truncf %41 : vector<16x32xf32> to vector<16x32xbf16>
    %c0_48 = arith.constant 0 : index
    %c0_49 = arith.constant 0 : index
    %c0_50 = arith.constant 0 : index
    %43 = vector.load %arg4[%c0_48, %c0_49, %c0_50] : memref<3x32x32xbf16, #tpu.memory_space<vmem>>, vector<1x32x32xbf16>
    %44 = vector.shape_cast %43 : vector<1x32x32xbf16> to vector<32x32xbf16>
    %cst_51 = arith.constant dense<0.000000e+00> : vector<16x32xf32>
    %45 = tpu.matmul %42, %44, %cst_51 {dimension_numbers = #tpu.dot_dimension_numbers<[1], [0], [0], [1], [0, 0, 1, 1], [], []>} : vector<16x32xbf16>, vector<32x32xbf16>, vector<16x32xf32> -> vector<16x32xf32>
    %46 = arith.addf %39, %45 : vector<16x32xf32>
    %c0_52 = arith.constant 0 : index
    %c1_53 = arith.constant 1 : index
    %c0_54 = arith.constant 0 : index
    %47 = vector.load %arg13[%c0_52, %c1_53, %c0_54] : memref<2x10x32xf32, #tpu.memory_space<vmem>>, vector<2x8x32xf32>
    %48 = vector.shape_cast %47 : vector<2x8x32xf32> to vector<16x32xf32>
    %49 = arith.truncf %48 : vector<16x32xf32> to vector<16x32xbf16>
    %c1_55 = arith.constant 1 : index
    %c0_56 = arith.constant 0 : index
    %c0_57 = arith.constant 0 : index
    %50 = vector.load %arg4[%c1_55, %c0_56, %c0_57] : memref<3x32x32xbf16, #tpu.memory_space<vmem>>, vector<1x32x32xbf16>
    %51 = vector.shape_cast %50 : vector<1x32x32xbf16> to vector<32x32xbf16>
    %cst_58 = arith.constant dense<0.000000e+00> : vector<16x32xf32>
    %52 = tpu.matmul %49, %51, %cst_58 {dimension_numbers = #tpu.dot_dimension_numbers<[1], [0], [0], [1], [0, 0, 1, 1], [], []>} : vector<16x32xbf16>, vector<32x32xbf16>, vector<16x32xf32> -> vector<16x32xf32>
    %53 = arith.addf %46, %52 : vector<16x32xf32>
    %c0_59 = arith.constant 0 : index
    %c2_60 = arith.constant 2 : index
    %c0_61 = arith.constant 0 : index
    %54 = vector.load %arg13[%c0_59, %c2_60, %c0_61] : memref<2x10x32xf32, #tpu.memory_space<vmem>>, vector<2x8x32xf32>
    %55 = vector.shape_cast %54 : vector<2x8x32xf32> to vector<16x32xf32>
    %56 = arith.truncf %55 : vector<16x32xf32> to vector<16x32xbf16>
    %c2_62 = arith.constant 2 : index
    %c0_63 = arith.constant 0 : index
    %c0_64 = arith.constant 0 : index
    %57 = vector.load %arg4[%c2_62, %c0_63, %c0_64] : memref<3x32x32xbf16, #tpu.memory_space<vmem>>, vector<1x32x32xbf16>
    %58 = vector.shape_cast %57 : vector<1x32x32xbf16> to vector<32x32xbf16>
    %cst_65 = arith.constant dense<0.000000e+00> : vector<16x32xf32>
    %59 = tpu.matmul %56, %58, %cst_65 {dimension_numbers = #tpu.dot_dimension_numbers<[1], [0], [0], [1], [0, 0, 1, 1], [], []>} : vector<16x32xbf16>, vector<32x32xbf16>, vector<16x32xf32> -> vector<16x32xf32>
    %60 = arith.addf %53, %59 : vector<16x32xf32>
    %c0_66 = arith.constant 0 : index
    %c0_67 = arith.constant 0 : index
    %61 = vector.load %arg5[%c0_66, %c0_67] : memref<1x32xf32, #tpu.memory_space<vmem>>, vector<1x32xf32>
    %62 = vector.broadcast %61 : vector<1x32xf32> to vector<16x32xf32>
    %63 = arith.addf %60, %62 : vector<16x32xf32>
    %cst_68 = arith.constant 0.000000e+00 : f32
    %64 = vector.broadcast %cst_68 : f32 to vector<16x32xf32>
    %65 = arith.maximumf %63, %64 : vector<16x32xf32>
    %66 = vector.shape_cast %65 : vector<16x32xf32> to vector<2x8x32xf32>
    %67 = vector.shape_cast %66 : vector<2x8x32xf32> to vector<1x2x8x32xf32>
    %cst_69 = arith.constant dense<0xFF800000> : vector<1x2x32xf32>
    %68 = vector.multi_reduction <maximumf>, %67, %cst_69 [2] : vector<1x2x8x32xf32> to vector<1x2x32xf32>
    %69 = vector.extract_strided_slice %68 {offsets = [0, 0, 0], sizes = [1, 1, 32], strides = [1, 1, 1]} : vector<1x2x32xf32> to vector<1x1x32xf32>
    %70 = vector.shape_cast %69 : vector<1x1x32xf32> to vector<1x32xf32>
    %71 = arith.truncf %70 : vector<1x32xf32> to vector<1x32xbf16>
    %72 = vector.extract_strided_slice %68 {offsets = [0, 1, 0], sizes = [1, 1, 32], strides = [1, 1, 1]} : vector<1x2x32xf32> to vector<1x1x32xf32>
    %73 = vector.shape_cast %72 : vector<1x1x32xf32> to vector<1x32xf32>
    %74 = arith.truncf %73 : vector<1x32xf32> to vector<1x32xbf16>
    %c0_70 = arith.constant 0 : index
    %c0_71 = arith.constant 0 : index
    %75 = vector.load %arg6[%c0_70, %c0_71] : memref<32x32xbf16, #tpu.memory_space<vmem>>, vector<32x32xbf16>
    %cst_72 = arith.constant dense<0.000000e+00> : vector<1x32xf32>
    %76 = tpu.matmul %71, %75, %cst_72 {dimension_numbers = #tpu.dot_dimension_numbers<[1], [0], [0], [1], [0, 0, 1, 1], [], []>} : vector<1x32xbf16>, vector<32x32xbf16>, vector<1x32xf32> -> vector<1x32xf32>
    %c0_73 = arith.constant 0 : index
    %c0_74 = arith.constant 0 : index
    %77 = vector.load %arg7[%c0_73, %c0_74] : memref<32x32xbf16, #tpu.memory_space<vmem>>, vector<32x32xbf16>
    %cst_75 = arith.constant dense<0.000000e+00> : vector<1x32xf32>
    %78 = tpu.matmul %74, %77, %cst_75 {dimension_numbers = #tpu.dot_dimension_numbers<[1], [0], [0], [1], [0, 0, 1, 1], [], []>} : vector<1x32xbf16>, vector<32x32xbf16>, vector<1x32xf32> -> vector<1x32xf32>
    %79 = arith.addf %76, %78 : vector<1x32xf32>
    %c0_76 = arith.constant 0 : index
    %c0_77 = arith.constant 0 : index
    %80 = vector.load %arg8[%c0_76, %c0_77] : memref<1x32xf32, #tpu.memory_space<vmem>>, vector<1x32xf32>
    %81 = arith.addf %79, %80 : vector<1x32xf32>
    %cst_78 = arith.constant 0.000000e+00 : f32
    %82 = vector.broadcast %cst_78 : f32 to vector<1x32xf32>
    %83 = arith.maximumf %81, %82 : vector<1x32xf32>
    %84 = arith.truncf %83 : vector<1x32xf32> to vector<1x32xbf16>
    %c0_79 = arith.constant 0 : index
    %c0_80 = arith.constant 0 : index
    %85 = vector.load %arg9[%c0_79, %c0_80] : memref<32x128xbf16, #tpu.memory_space<vmem>>, vector<32x128xbf16>
    %cst_81 = arith.constant dense<0.000000e+00> : vector<1x128xf32>
    %86 = tpu.matmul %84, %85, %cst_81 {dimension_numbers = #tpu.dot_dimension_numbers<[1], [0], [0], [1], [0, 0, 1, 1], [], []>} : vector<1x32xbf16>, vector<32x128xbf16>, vector<1x128xf32> -> vector<1x128xf32>
    %c0_82 = arith.constant 0 : index
    %c0_83 = arith.constant 0 : index
    %87 = vector.load %arg10[%c0_82, %c0_83] : memref<1x128xf32, #tpu.memory_space<vmem>>, vector<1x128xf32>
    %88 = arith.addf %86, %87 : vector<1x128xf32>
    %89 = vector.shape_cast %88 : vector<1x128xf32> to vector<1x1x128xf32>
    %c0_84 = arith.constant 0 : index
    %c0_85 = arith.constant 0 : index
    %c0_86 = arith.constant 0 : index
    %90 = vector.load %arg11[%c0_84, %c0_85, %c0_86] : memref<1x1x128xf32, #tpu.memory_space<vmem>>, vector<1x1x128xf32>
    tpu.vector_store %arg11[%c0_84, %c0_85, %c0_86], %89 {strides = array<i32>} : memref<1x1x128xf32, #tpu.memory_space<vmem>>, vector<1x1x128xf32>,
    return
  }
  func.func @transform_0(%arg0: i32) -> (i32, i32, i32, i32) {
    %c0_i32 = arith.constant 0 : i32
    %c0_i32_0 = arith.constant 0 : i32
    %c0_i32_1 = arith.constant 0 : i32
    %c0_i32_2 = arith.constant 0 : i32
    return %arg0, %c0_i32, %c0_i32_0, %c0_i32_1 : i32, i32, i32, i32
  }
  func.func @transform_1(%arg0: i32) -> (i32, i32, i32) {
    %c0_i32 = arith.constant 0 : i32
    %c0_i32_0 = arith.constant 0 : i32
    %c0_i32_1 = arith.constant 0 : i32
    %c0_i32_2 = arith.constant 0 : i32
    return %c0_i32, %c0_i32_0, %c0_i32_1 : i32, i32, i32
  }
  func.func @transform_2(%arg0: i32) -> (i32, i32) {
    %c0_i32 = arith.constant 0 : i32
    %c0_i32_0 = arith.constant 0 : i32
    %c0_i32_1 = arith.constant 0 : i32
    return %c0_i32, %c0_i32_0 : i32, i32
  }
  func.func @transform_3(%arg0: i32) -> (i32, i32, i32) {
    %c0_i32 = arith.constant 0 : i32
    %c0_i32_0 = arith.constant 0 : i32
    %c0_i32_1 = arith.constant 0 : i32
    %c0_i32_2 = arith.constant 0 : i32
    return %c0_i32, %c0_i32_0, %c0_i32_1 : i32, i32, i32
  }
  func.func @transform_4(%arg0: i32) -> (i32, i32) {
    %c0_i32 = arith.constant 0 : i32
    %c0_i32_0 = arith.constant 0 : i32
    %c0_i32_1 = arith.constant 0 : i32
    return %c0_i32, %c0_i32_0 : i32, i32
  }
  func.func @transform_5(%arg0: i32) -> (i32, i32) {
    %c0_i32 = arith.constant 0 : i32
    %c0_i32_0 = arith.constant 0 : i32
    %c0_i32_1 = arith.constant 0 : i32
    return %c0_i32, %c0_i32_0 : i32, i32
  }
  func.func @transform_6(%arg0: i32) -> (i32, i32) {
    %c0_i32 = arith.constant 0 : i32
    %c0_i32_0 = arith.constant 0 : i32
    %c0_i32_1 = arith.constant 0 : i32
    return %c0_i32, %c0_i32_0 : i32, i32
  }
  func.func @transform_7(%arg0: i32) -> (i32, i32) {
    %c0_i32 = arith.constant 0 : i32
    %c0_i32_0 = arith.constant 0 : i32
    %c0_i32_1 = arith.constant 0 : i32
    return %c0_i32, %c0_i32_0 : i32, i32
  }
  func.func @transform_8(%arg0: i32) -> (i32, i32) {
    %c0_i32 = arith.constant 0 : i32
    %c0_i32_0 = arith.constant 0 : i32
    %c0_i32_1 = arith.constant 0 : i32
    return %c0_i32, %c0_i32_0 : i32, i32
  }
  func.func @transform_9(%arg0: i32) -> (i32, i32) {
    %c0_i32 = arith.constant 0 : i32
    %c0_i32_0 = arith.constant 0 : i32
    %c0_i32_1 = arith.constant 0 : i32
    return %c0_i32, %c0_i32_0 : i32, i32
  }
  func.func @transform_10(%arg0: i32) -> (i32, i32, i32) {
    %c0_i32 = arith.constant 0 : i32
    %c0_i32_0 = arith.constant 0 : i32
    %c0_i32_1 = arith.constant 0 : i32
    return %arg0, %c0_i32, %c0_i32_0 : i32, i32, i32
  }
}

</mosaic_0001>

<llo_original>
// kernel: classifier_forward.1
$region0: #{classifier_forward.1}
  #allocation0 [shape = 'u32[]', space=smem, size = 0x4, offset = 0x4, fixed_abs, tag = 'smem constant byte address 0x4 - core index']
  #allocation1 [shape = 'u32[144,128]{1,0:T(1,128)}', space=vmem, size = 0x12000, scoped, tag = 'internal scratch']
  #allocation2 [shape = 'f32[2,10,32]{2,1,0:T(8,128)}', space=vmem, size = 0x4000, scoped, tag = 'scratch operand']
  #allocation3 [shape = 'f32[2,10,32]{2,1,0:T(8,128)}', space=vmem, size = 0x4000, scoped, tag = 'scratch operand']
  %s0 = inlined_call_operand.vmem [shape: bf16[2,2,8,32], index: 0, kind: input, shape index: {}]
  %s1 = inlined_call_operand.vmem [shape: bf16[3,32,32], index: 1, kind: input, shape index: {}]
  %s2 = inlined_call_operand.vmem [shape: f32[1,32], index: 2, kind: input, shape index: {}]
  %s3 = inlined_call_operand.vmem [shape: bf16[3,32,32], index: 3, kind: input, shape index: {}]
  %s4 = inlined_call_operand.vmem [shape: f32[1,32], index: 4, kind: input, shape index: {}]
  %s5 = inlined_call_operand.vmem [shape: bf16[32,32], index: 5, kind: input, shape index: {}]
  %s6 = inlined_call_operand.vmem [shape: bf16[32,32], index: 6, kind: input, shape index: {}]
  %s7 = inlined_call_operand.vmem [shape: f32[1,32], index: 7, kind: input, shape index: {}]
  %s8 = inlined_call_operand.vmem [shape: bf16[32,128], index: 8, kind: input, shape index: {}]
  %s9 = inlined_call_operand.vmem [shape: f32[1,128], index: 9, kind: input, shape index: {}]
  %s10 = inlined_call_operand.hbm [shape: f32[2,1,128], index: 10, kind: output, shape index: {}]
  %s11 = sld [smem:[#allocation0]]
  $region73: #{classifier_forward.1} parent=0
    _
  %s13 = ssub.s32 1, %s11
  %s14 = scalar_select 0, %s13, %s11
  $region1: #{classifier_forward.1} parent=0
    #allocation4 [shape = 'u8[1024]{0}', space=vmem, size = 0x400, scoped, tag = 'output window, operand 0']
    #allocation5 [shape = 's32[2]{0}', space=sflag, size = 0x8, scoped, tag = 'scoped memory for classifier_forward.1']
    %15 = vsyncpa [#allocation5], 0
    %s16 = scalar_lea.sflag [#allocation5], 1
    %17 = vsyncpa %s16, 0
    loop: start=0, step=1, limit=4
    $region2: #{classifier_forward.1} parent=1 // loop_pre_header
      _
    $region3: #{classifier_forward.1} parent=1 // loop_header
      %s19 = sphi 0, %s23
      %p20 = scmp.ge.s32.totalorder %s19, 4
      %s29 = sphi 0, %s31
      %s32 = sphi 0, %s29
      %s33 = sphi 0, %s32
      %s49 = sphi 0, %s33
      %s53 = sphi 0, %s53
      %s55 = sphi 0, %s53
      %s56 = sphi 0, %s55
      %s70 = sphi 0, %s56
      %s74 = sphi 0, %s74
      %s76 = sphi 0, %s74
      %s77 = sphi 0, %s76
      %s91 = sphi 0, %s77
      %s95 = sphi 0, %s95
      %s97 = sphi 0, %s95
      %s98 = sphi 0, %s97
      %s112 = sphi 0, %s98
      %s116 = sphi 0, %s116
      %s118 = sphi 0, %s116
      %s119 = sphi 0, %s118
      %s133 = sphi 0, %s119
      %s137 = sphi 0, %s137
      %s139 = sphi 0, %s137
      %s140 = sphi 0, %s139
      %s154 = sphi 0, %s140
      %s158 = sphi 0, %s158
      %s160 = sphi 0, %s158
      %s161 = sphi 0, %s160
      %s175 = sphi 0, %s161
      %s179 = sphi 0, %s179
      %s181 = sphi 0, %s179
      %s182 = sphi 0, %s181
      %s196 = sphi 0, %s182
      %s200 = sphi 0, %s200
      %s202 = sphi 0, %s200
      %s203 = sphi 0, %s202
      %s217 = sphi 0, %s203
      %s221 = sphi 0, %s221
      %s223 = sphi 0, %s221
      %s224 = sphi 0, %s223
      %s238 = sphi 0, %s224
      %s244 = sphi 0, %s246
      %s247 = sphi 0, %s244
      %s248 = sphi 0, %s247
      %s264 = sphi 0, %s248
    $region4: #{classifier_forward.1} parent=1 // loop_header_branch
      %22 = sbr.rel (%p20) target = $region8
    $region5: #{classifier_forward.1} parent=1 // loop_body
      %s24 = ssub.s32 %s19, 1
      %s25 = ssub.s32 %s19, 2
      %s26 = sadd.s32 %s19, 1
      %s27 = ssub.s32 %s19, %s26
      %p28 = scmp.eq.s32.totalorder %s27, 0
      %s30 = sadd.s32 %s29, 1
      %s31 = scalar_select %p28, %s29, %s30
      %p34 = pneg %p28
      %p35 = scmp.eq.s32.totalorder %s19, 1
      %p36 = por %p34, %p35
      %p37 = scmp.ne.s32.totalorder %s29, %s32
      %p38 = scmp.eq.s32.totalorder %s19, 0
      %p39 = por %p37, %p38
      %p40 = scmp.ne.s32.totalorder %s29, %s32
      %p41 = scmp.eq.s32.totalorder %s24, 1
      %p42 = por %p40, %p41
      %p43 = scmp.ne.s32.totalorder %s32, %s33
      %p44 = scmp.eq.s32.totalorder %s24, 0
      %p45 = por %p43, %p44
      %p46 = scmp.ne.s32.totalorder %s32, %s33
      %p47 = scmp.eq.s32.totalorder %s25, 1
      %p48 = por %p46, %p47
      %p50 = scmp.ne.s32.totalorder %s33, %s49
      %p51 = scmp.eq.s32.totalorder %s25, 0
      %p52 = por %p50, %p51
      %s54 = sadd.s32 %s53, 1
      %p57 = scmp.eq.s32.totalorder %s19, 1
      %p58 = scmp.ne.s32.totalorder %s53, %s55
      %p59 = scmp.eq.s32.totalorder %s19, 0
      %p60 = por %p58, %p59
      %p61 = scmp.ne.s32.totalorder %s53, %s55
      %p62 = scmp.eq.s32.totalorder %s24, 1
      %p63 = por %p61, %p62
      %p64 = scmp.ne.s32.totalorder %s55, %s56
      %p65 = scmp.eq.s32.totalorder %s24, 0
      %p66 = por %p64, %p65
      %p67 = scmp.ne.s32.totalorder %s55, %s56
      %p68 = scmp.eq.s32.totalorder %s25, 1
      %p69 = por %p67, %p68
      %p71 = scmp.ne.s32.totalorder %s56, %s70
      %p72 = scmp.eq.s32.totalorder %s25, 0
      %p73 = por %p71, %p72
      %s75 = sadd.s32 %s74, 1
      %p78 = scmp.eq.s32.totalorder %s19, 1
      %p79 = scmp.ne.s32.totalorder %s74, %s76
      %p80 = scmp.eq.s32.totalorder %s19, 0
      %p81 = por %p79, %p80
      %p82 = scmp.ne.s32.totalorder %s74, %s76
      %p83 = scmp.eq.s32.totalorder %s24, 1
      %p84 = por %p82, %p83
      %p85 = scmp.ne.s32.totalorder %s76, %s77
      %p86 = scmp.eq.s32.totalorder %s24, 0
      %p87 = por %p85, %p86
      %p88 = scmp.ne.s32.totalorder %s76, %s77
      %p89 = scmp.eq.s32.totalorder %s25, 1
      %p90 = por %p88, %p89
      %p92 = scmp.ne.s32.totalorder %s77, %s91
      %p93 = scmp.eq.s32.totalorder %s25, 0
      %p94 = por %p92, %p93
      %s96 = sadd.s32 %s95, 1
      %p99 = scmp.eq.s32.totalorder %s19, 1
      %p100 = scmp.ne.s32.totalorder %s95, %s97
      %p101 = scmp.eq.s32.totalorder %s19, 0
      %p102 = por %p100, %p101
      %p103 = scmp.ne.s32.totalorder %s95, %s97
      %p104 = scmp.eq.s32.totalorder %s24, 1
      %p105 = por %p103, %p104
      %p106 = scmp.ne.s32.totalorder %s97, %s98
      %p107 = scmp.eq.s32.totalorder %s24, 0
      %p108 = por %p106, %p107
      %p109 = scmp.ne.s32.totalorder %s97, %s98
      %p110 = scmp.eq.s32.totalorder %s25, 1
      %p111 = por %p109, %p110
      %p113 = scmp.ne.s32.totalorder %s98, %s112
      %p114 = scmp.eq.s32.totalorder %s25, 0
      %p115 = por %p113, %p114
      %s117 = sadd.s32 %s116, 1
      %p120 = scmp.eq.s32.totalorder %s19, 1
      %p121 = scmp.ne.s32.totalorder %s116, %s118
      %p122 = scmp.eq.s32.totalorder %s19, 0
      %p123 = por %p121, %p122
      %p124 = scmp.ne.s32.totalorder %s116, %s118
      %p125 = scmp.eq.s32.totalorder %s24, 1
      %p126 = por %p124, %p125
      %p127 = scmp.ne.s32.totalorder %s118, %s119
      %p128 = scmp.eq.s32.totalorder %s24, 0
      %p129 = por %p127, %p128
      %p130 = scmp.ne.s32.totalorder %s118, %s119
      %p131 = scmp.eq.s32.totalorder %s25, 1
      %p132 = por %p130, %p131
      %p134 = scmp.ne.s32.totalorder %s119, %s133
      %p135 = scmp.eq.s32.totalorder %s25, 0
      %p136 = por %p134, %p135
      %s138 = sadd.s32 %s137, 1
      %p141 = scmp.eq.s32.totalorder %s19, 1
      %p142 = scmp.ne.s32.totalorder %s137, %s139
      %p143 = scmp.eq.s32.totalorder %s19, 0
      %p144 = por %p142, %p143
      %p145 = scmp.ne.s32.totalorder %s137, %s139
      %p146 = scmp.eq.s32.totalorder %s24, 1
      %p147 = por %p145, %p146
      %p148 = scmp.ne.s32.totalorder %s139, %s140
      %p149 = scmp.eq.s32.totalorder %s24, 0
      %p150 = por %p148, %p149
      %p151 = scmp.ne.s32.totalorder %s139, %s140
      %p152 = scmp.eq.s32.totalorder %s25, 1
      %p153 = por %p151, %p152
      %p155 = scmp.ne.s32.totalorder %s140, %s154
      %p156 = scmp.eq.s32.totalorder %s25, 0
      %p157 = por %p155, %p156
      %s159 = sadd.s32 %s158, 1
      %p162 = scmp.eq.s32.totalorder %s19, 1
      %p163 = scmp.ne.s32.totalorder %s158, %s160
      %p164 = scmp.eq.s32.totalorder %s19, 0
      %p165 = por %p163, %p164
      %p166 = scmp.ne.s32.totalorder %s158, %s160
      %p167 = scmp.eq.s32.totalorder %s24, 1
      %p168 = por %p166, %p167
      %p169 = scmp.ne.s32.totalorder %s160, %s161
      %p170 = scmp.eq.s32.totalorder %s24, 0
      %p171 = por %p169, %p170
      %p172 = scmp.ne.s32.totalorder %s160, %s161
      %p173 = scmp.eq.s32.totalorder %s25, 1
      %p174 = por %p172, %p173
      %p176 = scmp.ne.s32.totalorder %s161, %s175
      %p177 = scmp.eq.s32.totalorder %s25, 0
      %p178 = por %p176, %p177
      %s180 = sadd.s32 %s179, 1
      %p183 = scmp.eq.s32.totalorder %s19, 1
      %p184 = scmp.ne.s32.totalorder %s179, %s181
      %p185 = scmp.eq.s32.totalorder %s19, 0
      %p186 = por %p184, %p185
      %p187 = scmp.ne.s32.totalorder %s179, %s181
      %p188 = scmp.eq.s32.totalorder %s24, 1
      %p189 = por %p187, %p188
      %p190 = scmp.ne.s32.totalorder %s181, %s182
      %p191 = scmp.eq.s32.totalorder %s24, 0
      %p192 = por %p190, %p191
      %p193 = scmp.ne.s32.totalorder %s181, %s182
      %p194 = scmp.eq.s32.totalorder %s25, 1
      %p195 = por %p193, %p194
      %p197 = scmp.ne.s32.totalorder %s182, %s196
      %p198 = scmp.eq.s32.totalorder %s25, 0
      %p199 = por %p197, %p198
      %s201 = sadd.s32 %s200, 1
      %p204 = scmp.eq.s32.totalorder %s19, 1
      %p205 = scmp.ne.s32.totalorder %s200, %s202
      %p206 = scmp.eq.s32.totalorder %s19, 0
      %p207 = por %p205, %p206
      %p208 = scmp.ne.s32.totalorder %s200, %s202
      %p209 = scmp.eq.s32.totalorder %s24, 1
      %p210 = por %p208, %p209
      %p211 = scmp.ne.s32.totalorder %s202, %s203
      %p212 = scmp.eq.s32.totalorder %s24, 0
      %p213 = por %p211, %p212
      %p214 = scmp.ne.s32.totalorder %s202, %s203
      %p215 = scmp.eq.s32.totalorder %s25, 1
      %p216 = por %p214, %p215
      %p218 = scmp.ne.s32.totalorder %s203, %s217
      %p219 = scmp.eq.s32.totalorder %s25, 0
      %p220 = por %p218, %p219
      %s222 = sadd.s32 %s221, 1
      %p225 = scmp.eq.s32.totalorder %s19, 1
      %p226 = scmp.ne.s32.totalorder %s221, %s223
      %p227 = scmp.eq.s32.totalorder %s19, 0
      %p228 = por %p226, %p227
      %p229 = scmp.ne.s32.totalorder %s221, %s223
      %p230 = scmp.eq.s32.totalorder %s24, 1
      %p231 = por %p229, %p230
      %p232 = scmp.ne.s32.totalorder %s223, %s224
      %p233 = scmp.eq.s32.totalorder %s24, 0
      %p234 = por %p232, %p233
      %p235 = scmp.ne.s32.totalorder %s223, %s224
      %p236 = scmp.eq.s32.totalorder %s25, 1
      %p237 = por %p235, %p236
      %p239 = scmp.ne.s32.totalorder %s224, %s238
      %p240 = scmp.eq.s32.totalorder %s25, 0
      %p241 = por %p239, %p240
      %s242 = ssub.s32 %s19, %s26
      %p243 = scmp.eq.s32.totalorder %s242, 0
      %s245 = sadd.s32 %s244, 1
      %s246 = scalar_select %p243, %s244, %s245
      %p249 = pneg %p243
      %p250 = scmp.eq.s32.totalorder %s19, 1
      %p251 = por %p249, %p250
      %p252 = scmp.ne.s32.totalorder %s244, %s247
      %p253 = scmp.eq.s32.totalorder %s19, 0
      %p254 = por %p252, %p253
      %p255 = scmp.ne.s32.totalorder %s244, %s247
      %p256 = scmp.eq.s32.totalorder %s24, 1
      %p257 = por %p255, %p256
      %p258 = scmp.ne.s32.totalorder %s247, %s248
      %p259 = scmp.eq.s32.totalorder %s24, 0
      %p260 = por %p258, %p259
      %p261 = scmp.ne.s32.totalorder %s247, %s248
      %p262 = scmp.eq.s32.totalorder %s25, 1
      %p263 = por %p261, %p262
      %p265 = scmp.ne.s32.totalorder %s248, %s264
      %p266 = scmp.eq.s32.totalorder %s25, 0
      %p267 = por %p265, %p266
      %p268 = scmp.le.s32.totalorder 1, %s19
      %p269 = scmp.lt.s32.totalorder %s19, 3
      %p270 = pnand %p268, %p269
      %p271 = pneg %p270
      // Predicated region
      $region9: #{classifier_forward.1} parent=5 // pred_check
        _
      $region10: #{classifier_forward.1} parent=5 // pred_check_branch
        %273 = sbr.rel (%p270) target = $region12
      $region11: #{classifier_forward.1} parent=5 // pred_region
        %s274 = ssub.s32 %s19, 1
        // Predicated region
        $region13: #{classifier_forward.1} parent=11 // pred_check
          %p275 = pneg %p66
        $region14: #{classifier_forward.1} parent=11 // pred_check_branch
          %277 = sbr.rel (%p275) target = $region16
        $region15: #{classifier_forward.1} parent=11 // pred_region
          _
        $region16: #{classifier_forward.1} parent=11 // pred_fallthru
          _
        // Predicated region
        $region17: #{classifier_forward.1} parent=11 // pred_check
          %p278 = pneg %p87
        $region18: #{classifier_forward.1} parent=11 // pred_check_branch
          %280 = sbr.rel (%p278) target = $region20
        $region19: #{classifier_forward.1} parent=11 // pred_region
          _
        $region20: #{classifier_forward.1} parent=11 // pred_fallthru
          _
        // Predicated region
        $region21: #{classifier_forward.1} parent=11 // pred_check
          %p281 = pneg %p108
        $region22: #{classifier_forward.1} parent=11 // pred_check_branch
          %283 = sbr.rel (%p281) target = $region24
        $region23: #{classifier_forward.1} parent=11 // pred_region
          _
        $region24: #{classifier_forward.1} parent=11 // pred_fallthru
          _
        // Predicated region
        $region25: #{classifier_forward.1} parent=11 // pred_check
          %p284 = pneg %p129
        $region26: #{classifier_forward.1} parent=11 // pred_check_branch
          %286 = sbr.rel (%p284) target = $region28
        $region27: #{classifier_forward.1} parent=11 // pred_region
          _
        $region28: #{classifier_forward.1} parent=11 // pred_fallthru
          _
        // Predicated region
        $region29: #{classifier_forward.1} parent=11 // pred_check
          %p287 = pneg %p150
        $region30: #{classifier_forward.1} parent=11 // pred_check_branch
          %289 = sbr.rel (%p287) target = $region32
        $region31: #{classifier_forward.1} parent=11 // pred_region
          _
        $region32: #{classifier_forward.1} parent=11 // pred_fallthru
          _
        // Predicated region
        $region33: #{classifier_forward.1} parent=11 // pred_check
          %p290 = pneg %p171
        $region34: #{classifier_forward.1} parent=11 // pred_check_branch
          %292 = sbr.rel (%p290) target = $region36
        $region35: #{classifier_forward.1} parent=11 // pred_region
          _
        $region36: #{classifier_forward.1} parent=11 // pred_fallthru
          _
        // Predicated region
        $region37: #{classifier_forward.1} parent=11 // pred_check
          %p293 = pneg %p192
        $region38: #{classifier_forward.1} parent=11 // pred_check_branch
          %295 = sbr.rel (%p293) target = $region40
        $region39: #{classifier_forward.1} parent=11 // pred_region
          _
        $region40: #{classifier_forward.1} parent=11 // pred_fallthru
          _
        // Predicated region
        $region41: #{classifier_forward.1} parent=11 // pred_check
          %p296 = pneg %p213
        $region42: #{classifier_forward.1} parent=11 // pred_check_branch
          %298 = sbr.rel (%p296) target = $region44
        $region43: #{classifier_forward.1} parent=11 // pred_region
          _
        $region44: #{classifier_forward.1} parent=11 // pred_fallthru
          _
        // Predicated region
        $region45: #{classifier_forward.1} parent=11 // pred_check
          %p299 = pneg %p234
        $region46: #{classifier_forward.1} parent=11 // pred_check_branch
          %301 = sbr.rel (%p299) target = $region48
        $region47: #{classifier_forward.1} parent=11 // pred_region
          _
        $region48: #{classifier_forward.1} parent=11 // pred_fallthru
          _
      $region12: #{classifier_forward.1} parent=5 // pred_fallthru
        _
      %p302 = scmp.lt.s32.totalorder %s19, 2
      // Predicated region
      $region49: #{classifier_forward.1} parent=5 // pred_check
        %p303 = pneg %p302
      $region50: #{classifier_forward.1} parent=5 // pred_check_branch
        %305 = sbr.rel (%p303) target = $region52
      $region51: #{classifier_forward.1} parent=5 // pred_region
        // Predicated region
        $region53: #{classifier_forward.1} parent=51 // pred_check
          %p306 = pneg %p39
        $region54: #{classifier_forward.1} parent=51 // pred_check_branch
          %308 = sbr.rel (%p306) target = $region56
        $region55: #{classifier_forward.1} parent=51 // pred_region
          %p309 = scmp.lt.s32.totalorder %s19, 1
          %s310 = scalar_select %p309, %s19, 1
          %s311 = smul.addr %s310, 2
          %s312 = smul.addr %s311, 4
          %s313 = scalar_lea.vmem %s0, %s312
        $region56: #{classifier_forward.1} parent=51 // pred_fallthru
          _
      $region52: #{classifier_forward.1} parent=5 // pred_fallthru
        _
      %p314 = scmp.le.s32.totalorder 1, %s19
      %p315 = scmp.lt.s32.totalorder %s19, 3
      %p316 = pnand %p314, %p315
      %p317 = pneg %p316
      // Predicated region
      $region57: #{classifier_forward.1} parent=5 // pred_check
        _
      $region58: #{classifier_forward.1} parent=5 // pred_check_branch
        %319 = sbr.rel (%p316) target = $region60
      $region59: #{classifier_forward.1} parent=5 // pred_region
        %s320 = ssub.s32 %s19, 1
        %p321 = scmp.lt.s32.totalorder %s24, 1
        %s322 = scalar_select %p321, %s24, 1
        %s323 = smul.addr %s322, 2
        %s324 = smul.addr %s323, 4
        %s325 = scalar_lea.vmem %s0, %s324
        %p326 = pneg %p45
        %p327 = pneg %p42
        %p328 = pneg %p66
        %p329 = pneg %p63
        %p330 = pneg %p87
        %p331 = pneg %p84
        %p332 = pneg %p108
        %p333 = pneg %p105
        %p334 = pneg %p129
        %p335 = pneg %p126
        %p336 = pneg %p150
        %p337 = pneg %p147
        %p338 = pneg %p171
        %p339 = pneg %p168
        %p340 = pneg %p192
        %p341 = pneg %p189
        %p342 = pneg %p213
        %p343 = pneg %p210
        %p344 = pneg %p234
        %p345 = pneg %p231
        %p346 = pneg %p260
        %p347 = pneg %p257
        %s348 = sand.u32 %s247, 1
        %s349 = scalar_lea.sflag [#allocation5], %s348
        %s350 = sand.u32 %s247, 1
        %s351 = scalar_lea.vmem [#allocation4], %s350
        %p352 = scmp.lt.s32.totalorder %s24, 1
        %s353 = scalar_select %p352, %s24, 1
        %s354 = smul.addr %s353, 2
        %s355 = smul.addr %s354, 4
        %s356 = scalar_lea.vmem %s0, %s355
        %v358 = vld [vmem:[%s356] sm:$0xf]
        %v359 = vld [vmem:[%s356 + $0x4] sm:$0xf]
        %v360 = vunpack.c.l.bf16 %v358
        %v361 = vunpack.c.l.bf16 %v359
        %vm362 = vcmask 253952
        %363 = vst.msk [vmem:[#allocation2] sm:$0x1] %vm362, 0.0
        %364 = vst.msk [vmem:[#allocation2 + $0x10] sm:$0x1] %vm362, 0.0
        %365 = vst.msk [vmem:[#allocation2 + $0x9] sm:$0x1] %vm362, 0.0
        %366 = vst.msk [vmem:[#allocation2 + $0x19] sm:$0x1] %vm362, 0.0
        %vm367 = vcmask 261120
        %368 = vst.msk [vmem:[#allocation2 + $0x1] sm:$0xff] %vm367, %v360
        %369 = vst.msk [vmem:[#allocation2 + $0x11] sm:$0xff] %vm367, %v361
        %v370 = vld [vmem:[#allocation2] sm:$0xff]
        %v371 = vld [vmem:[#allocation2 + $0x10] sm:$0xff]
        %v372 = vpack.c.bf16 %v371, %v370
        %v373 = vld [vmem:[%s1] sm:$0xf]
        %v374 = vld [vmem:[%s1 + $0x4] sm:$0xf]
        %v375 = vld [vmem:[%s1 + $0x8] sm:$0xf]
        %v376 = vld [vmem:[%s1 + $0xc] sm:$0xf]
        %v377 = vld [vmem:[#allocation2 + $0x1] sm:$0xff]
        %v378 = vld [vmem:[#allocation2 + $0x11] sm:$0xff]
        %v379 = vpack.c.bf16 %v378, %v377
        %s380 = scalar_lea.vmem %s1, 16
        %v381 = vld [vmem:[%s380] sm:$0xf]
        %v382 = vld [vmem:[%s380 + $0x4] sm:$0xf]
        %v383 = vld [vmem:[%s380 + $0x8] sm:$0xf]
        %v384 = vld [vmem:[%s380 + $0xc] sm:$0xf]
        %v389 = vunpack.c.l.b16 %v381
        %v390 = vunpack.c.l.b16 %v382
        %v391 = vunpack.c.l.b16 %v383
        %v392 = vunpack.c.l.b16 %v384
        %v393 = vpack.c.b16 %v390, %v389
        %v394 = vpack.c.b16 %v392, %v391
        %v398 = vsel %vm367, %v379, 0
        %400 = vmatprep.subr.bf16.mxu0 0
        %401 = vmatpush1.bf16.msra.mxu0 %v393
        %402 = vmatprep.subr.bf16.mxu0 0
        %403 = vmatpush1.bf16.msra.mxu0 %v394
        %404 = vmatprep.subr.bf16.mxu0 0
        %405 = vmatpush1.bf16.msra.mxu0 0
        %406 = vmatprep.subr.bf16.mxu0 0
        %407 = vmatpush1.bf16.msra.mxu0 0
        %408 = vmatprep.subr.bf16.mxu0 0
        %409 = vmatpush1.bf16.msra.mxu0 0
        %410 = vmatprep.subr.bf16.mxu0 0
        %411 = vmatpush1.bf16.msra.mxu0 0
        %412 = vmatprep.subr.bf16.mxu0 0
        %413 = vmatpush1.bf16.msra.mxu0 0
        %414 = vmatprep.subr.bf16.mxu0 0
        %415 = vmatpush1.bf16.msra.mxu0 0
        %416 = vmatprep.subr.bf16.mxu0 0
        %417 = vmatpush1.bf16.msra.mxu0 0
        %418 = vmatprep.subr.bf16.mxu0 0
        %419 = vmatpush1.bf16.msra.mxu0 0
        %420 = vmatprep.subr.bf16.mxu0 0
        %421 = vmatpush1.bf16.msra.mxu0 0
        %422 = vmatprep.subr.bf16.mxu0 0
        %423 = vmatpush1.bf16.msra.mxu0 0
        %424 = vmatprep.subr.bf16.mxu0 0
        %425 = vmatpush1.bf16.msra.mxu0 0
        %426 = vmatprep.subr.bf16.mxu0 0
        %427 = vmatpush1.bf16.msra.mxu0 0
        %428 = vmatprep.subr.bf16.mxu0 0
        %429 = vmatpush1.bf16.msra.mxu0 0
        %430 = vmatprep.subr.bf16.mxu0 0
        %431 = vmatpush1.bf16.msra.mxu0 0
        %432 = vmatprep.mubr.bf16.mxu0 0
        %433 = vmatmul.mubr.bf16.gmra.mrb[0].mxu0 %v398
        %v434 = vpop.f32.mrb[0].mxu0
        %v435 = vadd.f32 0.0, %v434
        %v436 = vpop.f32.mrb[0].mxu0
        %v437 = vpop.f32.mrb[0].mxu0
        %v438 = vadd.f32 0.0, %v437
        %v439 = vpop.f32.mrb[0].mxu0
        %440 = vdwg.mxu0
        %v445 = vunpack.c.l.b16 %v373
        %v446 = vunpack.c.l.b16 %v374
        %v447 = vunpack.c.l.b16 %v375
        %v448 = vunpack.c.l.b16 %v376
        %v449 = vpack.c.b16 %v446, %v445
        %v450 = vpack.c.b16 %v448, %v447
        %v454 = vsel %vm367, %v372, 0
        %456 = vmatprep.subr.bf16.mxu0 0
        %457 = vmatpush1.bf16.msra.mxu0 %v449
        %458 = vmatprep.subr.bf16.mxu0 0
        %459 = vmatpush1.bf16.msra.mxu0 %v450
        %460 = vmatprep.subr.bf16.mxu0 0
        %461 = vmatpush1.bf16.msra.mxu0 0
        %462 = vmatprep.subr.bf16.mxu0 0
        %463 = vmatpush1.bf16.msra.mxu0 0
        %464 = vmatprep.subr.bf16.mxu0 0
        %465 = vmatpush1.bf16.msra.mxu0 0
        %466 = vmatprep.subr.bf16.mxu0 0
        %467 = vmatpush1.bf16.msra.mxu0 0
        %468 = vmatprep.subr.bf16.mxu0 0
        %469 = vmatpush1.bf16.msra.mxu0 0
        %470 = vmatprep.subr.bf16.mxu0 0
        %471 = vmatpush1.bf16.msra.mxu0 0
        %472 = vmatprep.subr.bf16.mxu0 0
        %473 = vmatpush1.bf16.msra.mxu0 0
        %474 = vmatprep.subr.bf16.mxu0 0
        %475 = vmatpush1.bf16.msra.mxu0 0
        %476 = vmatprep.subr.bf16.mxu0 0
        %477 = vmatpush1.bf16.msra.mxu0 0
        %478 = vmatprep.subr.bf16.mxu0 0
        %479 = vmatpush1.bf16.msra.mxu0 0
        %480 = vmatprep.subr.bf16.mxu0 0
        %481 = vmatpush1.bf16.msra.mxu0 0
        %482 = vmatprep.subr.bf16.mxu0 0
        %483 = vmatpush1.bf16.msra.mxu0 0
        %484 = vmatprep.subr.bf16.mxu0 0
        %485 = vmatpush1.bf16.msra.mxu0 0
        %486 = vmatprep.subr.bf16.mxu0 0
        %487 = vmatpush1.bf16.msra.mxu0 0
        %488 = vmatprep.mubr.bf16.mxu0 0
        %489 = vmatmul.mubr.bf16.gmra.mrb[0].mxu0 %v454
        %v490 = vpop.f32.mrb[0].mxu0
        %v491 = vadd.f32 %v435, %v490
        %v492 = vpop.f32.mrb[0].mxu0
        %v493 = vpop.f32.mrb[0].mxu0
        %v494 = vadd.f32 %v438, %v493
        %v495 = vpop.f32.mrb[0].mxu0
        %496 = vdwg.mxu0
        %v497 = vld [vmem:[#allocation2 + $0x2] sm:$0xff]
        %v498 = vld [vmem:[#allocation2 + $0x12] sm:$0xff]
        %v499 = vpack.c.bf16 %v498, %v497
        %s500 = scalar_lea.vmem %s1, 32
        %v501 = vld [vmem:[%s500] sm:$0xf]
        %v502 = vld [vmem:[%s500 + $0x4] sm:$0xf]
        %v503 = vld [vmem:[%s500 + $0x8] sm:$0xf]
        %v504 = vld [vmem:[%s500 + $0xc] sm:$0xf]
        %v509 = vunpack.c.l.b16 %v501
        %v510 = vunpack.c.l.b16 %v502
        %v511 = vunpack.c.l.b16 %v503
        %v512 = vunpack.c.l.b16 %v504
        %v513 = vpack.c.b16 %v510, %v509
        %v514 = vpack.c.b16 %v512, %v511
        %v518 = vsel %vm367, %v499, 0
        %520 = vmatprep.subr.bf16.mxu0 0
        %521 = vmatpush1.bf16.msra.mxu0 %v513
        %522 = vmatprep.subr.bf16.mxu0 0
        %523 = vmatpush1.bf16.msra.mxu0 %v514
        %524 = vmatprep.subr.bf16.mxu0 0
        %525 = vmatpush1.bf16.msra.mxu0 0
        %526 = vmatprep.subr.bf16.mxu0 0
        %527 = vmatpush1.bf16.msra.mxu0 0
        %528 = vmatprep.subr.bf16.mxu0 0
        %529 = vmatpush1.bf16.msra.mxu0 0
        %530 = vmatprep.subr.bf16.mxu0 0
        %531 = vmatpush1.bf16.msra.mxu0 0
        %532 = vmatprep.subr.bf16.mxu0 0
        %533 = vmatpush1.bf16.msra.mxu0 0
        %534 = vmatprep.subr.bf16.mxu0 0
        %535 = vmatpush1.bf16.msra.mxu0 0
        %536 = vmatprep.subr.bf16.mxu0 0
        %537 = vmatpush1.bf16.msra.mxu0 0
        %538 = vmatprep.subr.bf16.mxu0 0
        %539 = vmatpush1.bf16.msra.mxu0 0
        %540 = vmatprep.subr.bf16.mxu0 0
        %541 = vmatpush1.bf16.msra.mxu0 0
        %542 = vmatprep.subr.bf16.mxu0 0
        %543 = vmatpush1.bf16.msra.mxu0 0
        %544 = vmatprep.subr.bf16.mxu0 0
        %545 = vmatpush1.bf16.msra.mxu0 0
        %546 = vmatprep.subr.bf16.mxu0 0
        %547 = vmatpush1.bf16.msra.mxu0 0
        %548 = vmatprep.subr.bf16.mxu0 0
        %549 = vmatpush1.bf16.msra.mxu0 0
        %550 = vmatprep.subr.bf16.mxu0 0
        %551 = vmatpush1.bf16.msra.mxu0 0
        %552 = vmatprep.mubr.bf16.mxu0 0
        %553 = vmatmul.mubr.bf16.gmra.mrb[0].mxu0 %v518
        %v554 = vpop.f32.mrb[0].mxu0
        %v555 = vadd.f32 0.0, %v554
        %v556 = vpop.f32.mrb[0].mxu0
        %v557 = vpop.f32.mrb[0].mxu0
        %v558 = vadd.f32 0.0, %v557
        %v559 = vpop.f32.mrb[0].mxu0
        %560 = vdwg.mxu0
        %v561 = vadd.f32 %v491, %v555
        %v562 = vadd.f32 %v494, %v558
        %v563 = vld [vmem:[%s2] sm:$0x1]
        %v565 = vlaneseq
        %v566 = vshrl.u32 %v565, 7
        %v567 = vsub.s32 0, %v566
        %v568 = vrot.slane %v563, %v567
        %v570 = vadd.f32 %v561, %v568
        %v571 = vadd.f32 %v562, %v568
        %v572 = vmax.f32 %v570, 0.0
        %v573 = vmax.f32 %v571, 0.0
        %574 = vst.msk [vmem:[#allocation3] sm:$0x1] %vm362, 0.0
        %575 = vst.msk [vmem:[#allocation3 + $0x10] sm:$0x1] %vm362, 0.0
        %576 = vst.msk [vmem:[#allocation3 + $0x9] sm:$0x1] %vm362, 0.0
        %577 = vst.msk [vmem:[#allocation3 + $0x19] sm:$0x1] %vm362, 0.0
        %578 = vst.msk [vmem:[#allocation3 + $0x1] sm:$0xff] %vm367, %v572
        %579 = vst.msk [vmem:[#allocation3 + $0x11] sm:$0xff] %vm367, %v573
        %v580 = vld [vmem:[#allocation3] sm:$0xff]
        %v581 = vld [vmem:[#allocation3 + $0x10] sm:$0xff]
        %v582 = vpack.c.bf16 %v581, %v580
        %v583 = vld [vmem:[%s3] sm:$0xf]
        %v584 = vld [vmem:[%s3 + $0x4] sm:$0xf]
        %v585 = vld [vmem:[%s3 + $0x8] sm:$0xf]
        %v586 = vld [vmem:[%s3 + $0xc] sm:$0xf]
        %v587 = vld [vmem:[#allocation3 + $0x1] sm:$0xff]
        %v588 = vld [vmem:[#allocation3 + $0x11] sm:$0xff]
        %v589 = vpack.c.bf16 %v588, %v587
        %s590 = scalar_lea.vmem %s3, 16
        %v591 = vld [vmem:[%s590] sm:$0xf]
        %v592 = vld [vmem:[%s590 + $0x4] sm:$0xf]
        %v593 = vld [vmem:[%s590 + $0x8] sm:$0xf]
        %v594 = vld [vmem:[%s590 + $0xc] sm:$0xf]
        %v599 = vunpack.c.l.b16 %v591
        %v600 = vunpack.c.l.b16 %v592
        %v601 = vunpack.c.l.b16 %v593
        %v602 = vunpack.c.l.b16 %v594
        %v603 = vpack.c.b16 %v600, %v599
        %v604 = vpack.c.b16 %v602, %v601
        %v608 = vsel %vm367, %v589, 0
        %610 = vmatprep.subr.bf16.mxu0 0
        %611 = vmatpush1.bf16.msra.mxu0 %v603
        %612 = vmatprep.subr.bf16.mxu0 0
        %613 = vmatpush1.bf16.msra.mxu0 %v604
        %614 = vmatprep.subr.bf16.mxu0 0
        %615 = vmatpush1.bf16.msra.mxu0 0
        %616 = vmatprep.subr.bf16.mxu0 0
        %617 = vmatpush1.bf16.msra.mxu0 0
        %618 = vmatprep.subr.bf16.mxu0 0
        %619 = vmatpush1.bf16.msra.mxu0 0
        %620 = vmatprep.subr.bf16.mxu0 0
        %621 = vmatpush1.bf16.msra.mxu0 0
        %622 = vmatprep.subr.bf16.mxu0 0
        %623 = vmatpush1.bf16.msra.mxu0 0
        %624 = vmatprep.subr.bf16.mxu0 0
        %625 = vmatpush1.bf16.msra.mxu0 0
        %626 = vmatprep.subr.bf16.mxu0 0
        %627 = vmatpush1.bf16.msra.mxu0 0
        %628 = vmatprep.subr.bf16.mxu0 0
        %629 = vmatpush1.bf16.msra.mxu0 0
        %630 = vmatprep.subr.bf16.mxu0 0
        %631 = vmatpush1.bf16.msra.mxu0 0
        %632 = vmatprep.subr.bf16.mxu0 0
        %633 = vmatpush1.bf16.msra.mxu0 0
        %634 = vmatprep.subr.bf16.mxu0 0
        %635 = vmatpush1.bf16.msra.mxu0 0
        %636 = vmatprep.subr.bf16.mxu0 0
        %637 = vmatpush1.bf16.msra.mxu0 0
        %638 = vmatprep.subr.bf16.mxu0 0
        %639 = vmatpush1.bf16.msra.mxu0 0
        %640 = vmatprep.subr.bf16.mxu0 0
        %641 = vmatpush1.bf16.msra.mxu0 0
        %642 = vmatprep.mubr.bf16.mxu0 0
        %643 = vmatmul.mubr.bf16.gmra.mrb[0].mxu0 %v608
        %v644 = vpop.f32.mrb[0].mxu0
        %v645 = vadd.f32 0.0, %v644
        %v646 = vpop.f32.mrb[0].mxu0
        %v647 = vpop.f32.mrb[0].mxu0
        %v648 = vadd.f32 0.0, %v647
        %v649 = vpop.f32.mrb[0].mxu0
        %650 = vdwg.mxu0
        %v655 = vunpack.c.l.b16 %v583
        %v656 = vunpack.c.l.b16 %v584
        %v657 = vunpack.c.l.b16 %v585
        %v658 = vunpack.c.l.b16 %v586
        %v659 = vpack.c.b16 %v656, %v655
        %v660 = vpack.c.b16 %v658, %v657
        %v664 = vsel %vm367, %v582, 0
        %666 = vmatprep.subr.bf16.mxu0 0
        %667 = vmatpush1.bf16.msra.mxu0 %v659
        %668 = vmatprep.subr.bf16.mxu0 0
        %669 = vmatpush1.bf16.msra.mxu0 %v660
        %670 = vmatprep.subr.bf16.mxu0 0
        %671 = vmatpush1.bf16.msra.mxu0 0
        %672 = vmatprep.subr.bf16.mxu0 0
        %673 = vmatpush1.bf16.msra.mxu0 0
        %674 = vmatprep.subr.bf16.mxu0 0
        %675 = vmatpush1.bf16.msra.mxu0 0
        %676 = vmatprep.subr.bf16.mxu0 0
        %677 = vmatpush1.bf16.msra.mxu0 0
        %678 = vmatprep.subr.bf16.mxu0 0
        %679 = vmatpush1.bf16.msra.mxu0 0
        %680 = vmatprep.subr.bf16.mxu0 0
        %681 = vmatpush1.bf16.msra.mxu0 0
        %682 = vmatprep.subr.bf16.mxu0 0
        %683 = vmatpush1.bf16.msra.mxu0 0
        %684 = vmatprep.subr.bf16.mxu0 0
        %685 = vmatpush1.bf16.msra.mxu0 0
        %686 = vmatprep.subr.bf16.mxu0 0
        %687 = vmatpush1.bf16.msra.mxu0 0
        %688 = vmatprep.subr.bf16.mxu0 0
        %689 = vmatpush1.bf16.msra.mxu0 0
        %690 = vmatprep.subr.bf16.mxu0 0
        %691 = vmatpush1.bf16.msra.mxu0 0
        %692 = vmatprep.subr.bf16.mxu0 0
        %693 = vmatpush1.bf16.msra.mxu0 0
        %694 = vmatprep.subr.bf16.mxu0 0
        %695 = vmatpush1.bf16.msra.mxu0 0
        %696 = vmatprep.subr.bf16.mxu0 0
        %697 = vmatpush1.bf16.msra.mxu0 0
        %698 = vmatprep.mubr.bf16.mxu0 0
        %699 = vmatmul.mubr.bf16.gmra.mrb[0].mxu0 %v664
        %v700 = vpop.f32.mrb[0].mxu0
        %v701 = vadd.f32 %v645, %v700
        %v702 = vpop.f32.mrb[0].mxu0
        %v703 = vpop.f32.mrb[0].mxu0
        %v704 = vadd.f32 %v648, %v703
        %v705 = vpop.f32.mrb[0].mxu0
        %706 = vdwg.mxu0
        %v707 = vld [vmem:[#allocation3 + $0x2] sm:$0xff]
        %v708 = vld [vmem:[#allocation3 + $0x12] sm:$0xff]
        %v709 = vpack.c.bf16 %v708, %v707
        %s710 = scalar_lea.vmem %s3, 32
        %v711 = vld [vmem:[%s710] sm:$0xf]
        %v712 = vld [vmem:[%s710 + $0x4] sm:$0xf]
        %v713 = vld [vmem:[%s710 + $0x8] sm:$0xf]
        %v714 = vld [vmem:[%s710 + $0xc] sm:$0xf]
        %v719 = vunpack.c.l.b16 %v711
        %v720 = vunpack.c.l.b16 %v712
        %v721 = vunpack.c.l.b16 %v713
        %v722 = vunpack.c.l.b16 %v714
        %v723 = vpack.c.b16 %v720, %v719
        %v724 = vpack.c.b16 %v722, %v721
        %v728 = vsel %vm367, %v709, 0
        %730 = vmatprep.subr.bf16.mxu0 0
        %731 = vmatpush1.bf16.msra.mxu0 %v723
        %732 = vmatprep.subr.bf16.mxu0 0
        %733 = vmatpush1.bf16.msra.mxu0 %v724
        %734 = vmatprep.subr.bf16.mxu0 0
        %735 = vmatpush1.bf16.msra.mxu0 0
        %736 = vmatprep.subr.bf16.mxu0 0
        %737 = vmatpush1.bf16.msra.mxu0 0
        %738 = vmatprep.subr.bf16.mxu0 0
        %739 = vmatpush1.bf16.msra.mxu0 0
        %740 = vmatprep.subr.bf16.mxu0 0
        %741 = vmatpush1.bf16.msra.mxu0 0
        %742 = vmatprep.subr.bf16.mxu0 0
        %743 = vmatpush1.bf16.msra.mxu0 0
        %744 = vmatprep.subr.bf16.mxu0 0
        %745 = vmatpush1.bf16.msra.mxu0 0
        %746 = vmatprep.subr.bf16.mxu0 0
        %747 = vmatpush1.bf16.msra.mxu0 0
        %748 = vmatprep.subr.bf16.mxu0 0
        %749 = vmatpush1.bf16.msra.mxu0 0
        %750 = vmatprep.subr.bf16.mxu0 0
        %751 = vmatpush1.bf16.msra.mxu0 0
        %752 = vmatprep.subr.bf16.mxu0 0
        %753 = vmatpush1.bf16.msra.mxu0 0
        %754 = vmatprep.subr.bf16.mxu0 0
        %755 = vmatpush1.bf16.msra.mxu0 0
        %756 = vmatprep.subr.bf16.mxu0 0
        %757 = vmatpush1.bf16.msra.mxu0 0
        %758 = vmatprep.subr.bf16.mxu0 0
        %759 = vmatpush1.bf16.msra.mxu0 0
        %760 = vmatprep.subr.bf16.mxu0 0
        %761 = vmatpush1.bf16.msra.mxu0 0
        %762 = vmatprep.mubr.bf16.mxu0 0
        %763 = vmatmul.mubr.bf16.gmra.mrb[0].mxu0 %v728
        %v764 = vpop.f32.mrb[0].mxu0
        %v765 = vadd.f32 0.0, %v764
        %v766 = vpop.f32.mrb[0].mxu0
        %v767 = vpop.f32.mrb[0].mxu0
        %v768 = vadd.f32 0.0, %v767
        %v769 = vpop.f32.mrb[0].mxu0
        %770 = vdwg.mxu0
        %v771 = vadd.f32 %v701, %v765
        %v772 = vadd.f32 %v704, %v768
        %v773 = vld [vmem:[%s4] sm:$0x1]
        %v775 = vlaneseq
        %v776 = vshrl.u32 %v775, 7
        %v777 = vsub.s32 0, %v776
        %v778 = vrot.slane %v773, %v777
        %v780 = vadd.f32 %v771, %v778
        %v781 = vadd.f32 %v772, %v778
        %v782 = vmax.f32 %v780, 0.0
        %v783 = vmax.f32 %v781, 0.0
        %v784 = vsel %vm367, %v782, -inf
        %v785 = vrot.slane %v784, 4
        %v786 = vmax.f32 %v784, %v785
        %v787 = vrot.slane %v786, 2
        %v788 = vmax.f32 %v786, %v787
        %v789 = vrot.slane %v788, 1
        %v790 = vmax.f32 %v788, %v789
        %v791 = vsel %vm367, %v783, -inf
        %v792 = vrot.slane %v791, 4
        %v793 = vmax.f32 %v791, %v792
        %v794 = vrot.slane %v793, 2
        %v795 = vmax.f32 %v793, %v794
        %v796 = vrot.slane %v795, 1
        %v797 = vmax.f32 %v795, %v796
        %v798 = vpack.c.bf16 %v790, %v790
        %v799 = vpack.c.bf16 %v797, %v797
        %v800 = vld [vmem:[%s5] sm:$0xf]
        %v801 = vld [vmem:[%s5 + $0x4] sm:$0xf]
        %v802 = vld [vmem:[%s5 + $0x8] sm:$0xf]
        %v803 = vld [vmem:[%s5 + $0xc] sm:$0xf]
        %v804 = vld [vmem:[%s6] sm:$0xf]
        %v805 = vld [vmem:[%s6 + $0x4] sm:$0xf]
        %v806 = vld [vmem:[%s6 + $0x8] sm:$0xf]
        %v807 = vld [vmem:[%s6 + $0xc] sm:$0xf]
        %v812 = vunpack.c.l.b16 %v804
        %v813 = vunpack.c.l.b16 %v805
        %v814 = vunpack.c.l.b16 %v806
        %v815 = vunpack.c.l.b16 %v807
        %v816 = vpack.c.b16 %v813, %v812
        %v817 = vpack.c.b16 %v815, %v814
        %v821 = vsel %vm367, %v799, 0
        %823 = vmatprep.subr.bf16.mxu0 0
        %824 = vmatpush1.bf16.msra.mxu0 %v816
        %825 = vmatprep.subr.bf16.mxu0 0
        %826 = vmatpush1.bf16.msra.mxu0 %v817
        %827 = vmatprep.subr.bf16.mxu0 0
        %828 = vmatpush1.bf16.msra.mxu0 0
        %829 = vmatprep.subr.bf16.mxu0 0
        %830 = vmatpush1.bf16.msra.mxu0 0
        %831 = vmatprep.subr.bf16.mxu0 0
        %832 = vmatpush1.bf16.msra.mxu0 0
        %833 = vmatprep.subr.bf16.mxu0 0
        %834 = vmatpush1.bf16.msra.mxu0 0
        %835 = vmatprep.subr.bf16.mxu0 0
        %836 = vmatpush1.bf16.msra.mxu0 0
        %837 = vmatprep.subr.bf16.mxu0 0
        %838 = vmatpush1.bf16.msra.mxu0 0
        %839 = vmatprep.subr.bf16.mxu0 0
        %840 = vmatpush1.bf16.msra.mxu0 0
        %841 = vmatprep.subr.bf16.mxu0 0
        %842 = vmatpush1.bf16.msra.mxu0 0
        %843 = vmatprep.subr.bf16.mxu0 0
        %844 = vmatpush1.bf16.msra.mxu0 0
        %845 = vmatprep.subr.bf16.mxu0 0
        %846 = vmatpush1.bf16.msra.mxu0 0
        %847 = vmatprep.subr.bf16.mxu0 0
        %848 = vmatpush1.bf16.msra.mxu0 0
        %849 = vmatprep.subr.bf16.mxu0 0
        %850 = vmatpush1.bf16.msra.mxu0 0
        %851 = vmatprep.subr.bf16.mxu0 0
        %852 = vmatpush1.bf16.msra.mxu0 0
        %853 = vmatprep.subr.bf16.mxu0 0
        %854 = vmatpush1.bf16.msra.mxu0 0
        %855 = vmatprep.mubr.bf16.mxu0 0
        %856 = vmatmul.mubr.bf16.gmra.mrb[0].mxu0 %v821
        %v857 = vpop.f32.mrb[0].mxu0
        %v858 = vadd.f32 0.0, %v857
        %v859 = vpop.f32.mrb[0].mxu0
        %v860 = vpop.f32.mrb[0].mxu0
        %v861 = vpop.f32.mrb[0].mxu0
        %862 = vdwg.mxu0
        %v867 = vunpack.c.l.b16 %v800
        %v868 = vunpack.c.l.b16 %v801
        %v869 = vunpack.c.l.b16 %v802
        %v870 = vunpack.c.l.b16 %v803
        %v871 = vpack.c.b16 %v868, %v867
        %v872 = vpack.c.b16 %v870, %v869
        %v876 = vsel %vm367, %v798, 0
        %878 = vmatprep.subr.bf16.mxu0 0
        %879 = vmatpush1.bf16.msra.mxu0 %v871
        %880 = vmatprep.subr.bf16.mxu0 0
        %881 = vmatpush1.bf16.msra.mxu0 %v872
        %882 = vmatprep.subr.bf16.mxu0 0
        %883 = vmatpush1.bf16.msra.mxu0 0
        %884 = vmatprep.subr.bf16.mxu0 0
        %885 = vmatpush1.bf16.msra.mxu0 0
        %886 = vmatprep.subr.bf16.mxu0 0
        %887 = vmatpush1.bf16.msra.mxu0 0
        %888 = vmatprep.subr.bf16.mxu0 0
        %889 = vmatpush1.bf16.msra.mxu0 0
        %890 = vmatprep.subr.bf16.mxu0 0
        %891 = vmatpush1.bf16.msra.mxu0 0
        %892 = vmatprep.subr.bf16.mxu0 0
        %893 = vmatpush1.bf16.msra.mxu0 0
        %894 = vmatprep.subr.bf16.mxu0 0
        %895 = vmatpush1.bf16.msra.mxu0 0
        %896 = vmatprep.subr.bf16.mxu0 0
        %897 = vmatpush1.bf16.msra.mxu0 0
        %898 = vmatprep.subr.bf16.mxu0 0
        %899 = vmatpush1.bf16.msra.mxu0 0
        %900 = vmatprep.subr.bf16.mxu0 0
        %901 = vmatpush1.bf16.msra.mxu0 0
        %902 = vmatprep.subr.bf16.mxu0 0
        %903 = vmatpush1.bf16.msra.mxu0 0
        %904 = vmatprep.subr.bf16.mxu0 0
        %905 = vmatpush1.bf16.msra.mxu0 0
        %906 = vmatprep.subr.bf16.mxu0 0
        %907 = vmatpush1.bf16.msra.mxu0 0
        %908 = vmatprep.subr.bf16.mxu0 0
        %909 = vmatpush1.bf16.msra.mxu0 0
        %910 = vmatprep.mubr.bf16.mxu0 0
        %911 = vmatmul.mubr.bf16.gmra.mrb[0].mxu0 %v876
        %v912 = vpop.f32.mrb[0].mxu0
        %v913 = vadd.f32 %v858, %v912
        %v914 = vpop.f32.mrb[0].mxu0
        %v915 = vpop.f32.mrb[0].mxu0
        %v916 = vpop.f32.mrb[0].mxu0
        %917 = vdwg.mxu0
        %v918 = vld [vmem:[%s7] sm:$0x1]
        %v919 = vadd.f32 %v913, %v918
        %v920 = vmax.f32 %v919, 0.0
        %v921 = vpack.c.bf16 %v920, %v920
        %v922 = vld [vmem:[%s8] sm:$0xf]
        %v923 = vld [vmem:[%s8 + $0x4] sm:$0xf]
        %v924 = vld [vmem:[%s8 + $0x8] sm:$0xf]
        %v925 = vld [vmem:[%s8 + $0xc] sm:$0xf]
        %v926 = vld [vmem:[%s9] sm:$0x1]
        %v931 = vunpack.c.l.b16 %v922
        %v932 = vunpack.c.l.b16 %v923
        %v933 = vunpack.c.l.b16 %v924
        %v934 = vunpack.c.l.b16 %v925
        %v935 = vpack.c.b16 %v932, %v931
        %v936 = vpack.c.b16 %v934, %v933
        %v940 = vsel %vm367, %v921, 0
        %942 = vmatprep.subr.bf16.mxu0 0
        %943 = vmatpush1.bf16.msra.mxu0 %v935
        %944 = vmatprep.subr.bf16.mxu0 0
        %945 = vmatpush1.bf16.msra.mxu0 %v936
        %946 = vmatprep.subr.bf16.mxu0 0
        %947 = vmatpush1.bf16.msra.mxu0 0
        %948 = vmatprep.subr.bf16.mxu0 0
        %949 = vmatpush1.bf16.msra.mxu0 0
        %950 = vmatprep.subr.bf16.mxu0 0
        %951 = vmatpush1.bf16.msra.mxu0 0
        %952 = vmatprep.subr.bf16.mxu0 0
        %953 = vmatpush1.bf16.msra.mxu0 0
        %954 = vmatprep.subr.bf16.mxu0 0
        %955 = vmatpush1.bf16.msra.mxu0 0
        %956 = vmatprep.subr.bf16.mxu0 0
        %957 = vmatpush1.bf16.msra.mxu0 0
        %958 = vmatprep.subr.bf16.mxu0 0
        %959 = vmatpush1.bf16.msra.mxu0 0
        %960 = vmatprep.subr.bf16.mxu0 0
        %961 = vmatpush1.bf16.msra.mxu0 0
        %962 = vmatprep.subr.bf16.mxu0 0
        %963 = vmatpush1.bf16.msra.mxu0 0
        %964 = vmatprep.subr.bf16.mxu0 0
        %965 = vmatpush1.bf16.msra.mxu0 0
        %966 = vmatprep.subr.bf16.mxu0 0
        %967 = vmatpush1.bf16.msra.mxu0 0
        %968 = vmatprep.subr.bf16.mxu0 0
        %969 = vmatpush1.bf16.msra.mxu0 0
        %970 = vmatprep.subr.bf16.mxu0 0
        %971 = vmatpush1.bf16.msra.mxu0 0
        %972 = vmatprep.subr.bf16.mxu0 0
        %973 = vmatpush1.bf16.msra.mxu0 0
        %974 = vmatprep.mubr.bf16.mxu0 0
        %975 = vmatmul.mubr.bf16.gmra.mrb[0].mxu0 %v940
        %v976 = vpop.f32.mrb[0].mxu0
        %v977 = vadd.f32 %v926, %v976
        %v978 = vpop.f32.mrb[0].mxu0
        %v979 = vpop.f32.mrb[0].mxu0
        %v980 = vpop.f32.mrb[0].mxu0
        %981 = vdwg.mxu0
        %982 = vst [vmem:[%s351] sm:$0x1] %v977
        %s983 = sand.u32 %s247, 1
        %s984 = scalar_lea.sflag [#allocation5], %s983
        %s985 = sand.u32 %s247, 1
        %s986 = scalar_lea.vmem [#allocation4], %s985
        // Predicated region
        $region61: #{classifier_forward.1} parent=59 // pred_check
          %p987 = pneg %p257
        $region62: #{classifier_forward.1} parent=59 // pred_check_branch
          %989 = sbr.rel (%p987) target = $region64
        $region63: #{classifier_forward.1} parent=59 // pred_region
          %s991 = ssub.s32 16, 16
          %992 = vsyncadd %s984, %s991
          %s993 = smul.addr %s24, 16
          %s994 = scalar_lea.hbm %s10, %s993
          %s996 = sshll.u32 %s986, 4
          %s997 = int_to_ptr.vmem [resolvable:$true] %s996
          %999 = dma.vmem_to_hbm [thread:$0]  %s997, 16, %s994, %s984
        $region64: #{classifier_forward.1} parent=59 // pred_fallthru
          _
      $region60: #{classifier_forward.1} parent=5 // pred_fallthru
        _
      %p1000 = scmp.le.s32.totalorder 2, %s19
      // Predicated region
      $region65: #{classifier_forward.1} parent=5 // pred_check
        %p1001 = pneg %p1000
      $region66: #{classifier_forward.1} parent=5 // pred_check_branch
        %1003 = sbr.rel (%p1001) target = $region68
      $region67: #{classifier_forward.1} parent=5 // pred_region
        %s1004 = ssub.s32 %s19, 2
        // Predicated region
        $region69: #{classifier_forward.1} parent=67 // pred_check
          %p1005 = pneg %p263
        $region70: #{classifier_forward.1} parent=67 // pred_check_branch
          %1007 = sbr.rel (%p1005) target = $region72
        $region71: #{classifier_forward.1} parent=67 // pred_region
          %s1008 = sand.u32 %s248, 1
          %s1009 = scalar_lea.sflag [#allocation5], %s1008
          %s1010 = sand.u32 %s248, 1
          %s1011 = scalar_lea.vmem [#allocation4], %s1010
          %1012 = dma.done %s1009, 16
        $region72: #{classifier_forward.1} parent=67 // pred_fallthru
          _
      $region68: #{classifier_forward.1} parent=5 // pred_fallthru
        _
    $region6: #{classifier_forward.1} parent=1 // loop_footer
      %s23 = sadd.s32 1, %s19
    $region7: #{classifier_forward.1} parent=1 // loop_footer_branch
      %18 = sbr.rel target = $region3
    $region8: #{classifier_forward.1} parent=1 // loop_exit
      _
    %1013 = vsyncpa [#allocation5], 1
    %s1014 = scalar_lea.sflag [#allocation5], 1
    %1015 = vsyncpa %s1014, 1

</llo_original>
